<compile_context>
chip_gen: v7x
topology: tpu7x:2x2x1
jax: 0.10.0
libtpu: 0.0.40
codegen_flags: <defaults>
</compile_context>

<pallas_src>
import functools

import jax
import jax.numpy as jnp
from jax.experimental import pallas as pl
from jax.experimental.pallas import tpu as pltpu


def _feat_kernel(*refs, has_view, final_sigmoid, compute_dtype):
    # Ref order (has_view):   net, ray, bias, w_fv, w_v, w_o, b_o, out
    # Ref order (no view):    net,      bias, w_fv,      w_o, b_o, out
    if has_view:
        net_ref, ray_ref, bias_ref, w_fv_ref, w_v_ref, w_o_ref, b_o_ref, out_ref = refs
    else:
        net_ref, bias_ref, w_fv_ref, w_o_ref, b_o_ref, out_ref = refs
        ray_ref = w_v_ref = None

    # feat_view matmul (MXU, f32 accumulation); in-kernel cast avoids an HBM cast pass.
    x = net_ref[...].astype(compute_dtype)
    h = jnp.dot(x, w_fv_ref[...], preferred_element_type=jnp.float32)

    if has_view:
        r = ray_ref[...].astype(compute_dtype)
        h = h + jnp.dot(r, w_v_ref[...], preferred_element_type=jnp.float32)

    # Per-batch folded bias: fc_z_view(z) + b_feat_view (+ b_fc_view).
    h = h + bias_ref[...].astype(jnp.float32)

    if has_view:  # ReLU only on the viewdirs path (matches the PyTorch module)
        h = jnp.maximum(h, 0.0)

    out = jnp.dot(h.astype(w_o_ref.dtype), w_o_ref[...],
                  preferred_element_type=jnp.float32)
    out = out + b_o_ref[...].astype(jnp.float32)
    if final_sigmoid:
        out = jax.nn.sigmoid(out)
    out_ref[...] = out.astype(out_ref.dtype)


def feat_layers_forward(net, z, ray_d, params, *,
                        use_viewdirs=True,
                        n_blocks_view=1,
                        final_sigmoid_activation=True,
                        compute_dtype=jnp.bfloat16,
                        out_dtype=None,
                        tile_n=None,
                        vmem_budget_bytes=24 * 1024 * 1024,
                        vmem_limit_bytes=48 * 1024 * 1024):
    """Pallas implementation of FeatLayers.forward.

    net:   (B, N, H)  float32
    z:     (B, z_dim) float32
    ray_d: (B, N, Dv) float32 or None
    compute_dtype: MXU input dtype (bf16 recommended; accumulation is f32 regardless).
    out_dtype: HBM output dtype; defaults to compute_dtype (bf16 halves writeback).
               Note: in the bf16 path the f32 intermediate h is recast to bf16 before
               the second GEMM, so precision loss compounds across both GEMMs.
    """
    if use_viewdirs and n_blocks_view > 1:
        # TODO(synk): blocks_view path (n_blocks_view > 1) not implemented — in the
        # reference module those layers are Linear(Dv+H -> H) applied to an H-dim
        # tensor, which is ill-typed; only n_blocks_view == 1 is well-defined.
        raise NotImplementedError(
            "n_blocks_view > 1 is not well-defined in the reference module")

    B, N, H = net.shape
    R = params["w_o"].shape[-1]
    has_view = bool(use_viewdirs) and (ray_d is not None)
    f32 = jnp.float32
    if out_dtype is None:
        out_dtype = compute_dtype

    # ---- wrapper-side folding (work independent of N; fuses under jit) ------
    # Per-batch bias: fc_z_view(z) + feat_view.bias (+ fc_view.bias).
    bias = (z.astype(f32) @ params["w_z"].astype(f32)
            + params["b_z"].astype(f32).reshape(1, -1)
            + params["b_fv"].astype(f32).reshape(1, -1))
    if has_view:
        bias = bias + params["b_v"].astype(f32).reshape(1, -1)
    bias = bias.reshape(B, 1, H)

    # Small, resident weights cast to MXU dtype (constant-folds under jit).
    w_fv = params["w_fv"].astype(compute_dtype)                        # (H, H)
    w_o = params["w_o"].astype(compute_dtype)                          # (H, R)
    b_o = params["b_o"].astype(f32).reshape(1, R)                      # (1, R)
    if has_view:
        Dv = ray_d.shape[-1]
        w_v = params["w_v"].astype(compute_dtype)                      # (Dv, H)
    else:
        Dv = 0
        w_v = None

    # ---- N-tile sizing against a corrected per-step VMEM footprint ----------
    if tile_n is None:
        in_item = jnp.dtype(net.dtype).itemsize
        comp_item = jnp.dtype(compute_dtype).itemsize
        out_item = jnp.dtype(out_dtype).itemsize
        per_row = 2 * (H + Dv) * in_item          # double-buffered net/ray input tiles
        per_row += 2 * R * out_item               # double-buffered output tile
        per_row += (H + Dv) * comp_item           # in-kernel compute-dtype recast of x/r
        per_row += H * 4 + H * comp_item          # f32 intermediate h + recast for GEMM 2
        per_row += R * 4                          # f32 accumulator before store cast
        weight_bytes = 2 * ((H * H + Dv * H + H * R) * comp_item + (H + R) * 4)
        avail = max(vmem_budget_bytes - weight_bytes, 1 << 20)
        tn = avail // max(per_row, 1)
        tn = max(8, min(int(tn), 1024))           # mem-bound plateau ~512-1024 rows
        tn = (tn // 8) * 8                        # sublane multiple
        tile_n = N if tn >= N else tn
    TN = tile_n

    kernel = functools.partial(_feat_kernel,
                               has_view=has_view,
                               final_sigmoid=final_sigmoid_activation,
                               compute_dtype=compute_dtype)

    in_specs = [pl.BlockSpec((None, TN, H), lambda b, n: (b, n, 0))]    # net tile
    inputs = [net]
    if has_view:
        in_specs.append(pl.BlockSpec((None, TN, Dv), lambda b, n: (b, n, 0)))  # ray tile
        inputs.append(ray_d)
    in_specs.append(pl.BlockSpec((None, 1, H), lambda b, n: (b, 0, 0)))  # per-batch bias
    inputs.append(bias)
    in_specs.append(pl.BlockSpec(w_fv.shape, lambda b, n: (0, 0)))       # resident weights
    inputs.append(w_fv)
    if has_view:
        in_specs.append(pl.BlockSpec(w_v.shape, lambda b, n: (0, 0)))
        inputs.append(w_v)
    in_specs.append(pl.BlockSpec(w_o.shape, lambda b, n: (0, 0)))
    inputs.append(w_o)
    in_specs.append(pl.BlockSpec(b_o.shape, lambda b, n: (0, 0)))
    inputs.append(b_o)

    grid_spec = pltpu.PrefetchScalarGridSpec(
        num_scalar_prefetch=0,
        grid=(B, pl.cdiv(N, TN)),
        in_specs=in_specs,
        # Unpadded, narrow last dim (R < 128 -> masked stores): irrelevant in a
        # memory-bound kernel and it keeps HBM writeback at exactly TN x R.
        out_specs=pl.BlockSpec((None, TN, R), lambda b, n: (b, n, 0)),
    )

    out = pl.pallas_call(
        kernel,
        out_shape=jax.ShapeDtypeStruct((B, N, R), out_dtype),
        grid_spec=grid_spec,
        compiler_params=pltpu.CompilerParams(
            dimension_semantics=("parallel", "parallel"),
            vmem_limit_bytes=vmem_limit_bytes),
    )(*inputs)
    return out


def _reference_forward(net, z, ray_d, params, *, use_viewdirs, final_sigmoid_activation):
    """Pure-JAX reference mirroring the PyTorch forward (for correctness checks)."""
    h = net @ params["w_fv"] + params["b_fv"]
    h = h + (z @ params["w_z"] + params["b_z"])[:, None, :]
    if use_viewdirs and ray_d is not None:
        h = h + (ray_d @ params["w_v"] + params["b_v"])
        h = jax.nn.relu(h)
    out = h @ params["w_o"] + params["b_o"]
    if final_sigmoid_activation:
        out = jax.nn.sigmoid(out)
    return out


def _init_params(key, z_dim, hidden_size, dim_embed_view, rgb_out_dim):
    """Deterministic synthetic parameters; weights stored (in_features, out_features)."""
    ks = jax.random.split(key, 8)

    def lin(kw, kb, din, dout):
        w = jax.random.normal(kw, (din, dout), jnp.float32) * (1.0 / jnp.sqrt(din))
        b = jax.random.normal(kb, (1, dout), jnp.float32) * 0.01
        return w, b

    w_fv, b_fv = lin(ks[0], ks[1], hidden_size, hidden_size)       # feat_view
    w_z, b_z = lin(ks[2], ks[3], z_dim, hidden_size)               # fc_z_view
    w_v, b_v = lin(ks[4], ks[5], dim_embed_view, hidden_size)      # fc_view
    w_o, b_o = lin(ks[6], ks[7], hidden_size, rgb_out_dim)         # feat_out
    return dict(w_fv=w_fv, b_fv=b_fv, w_z=w_z, b_z=b_z,
                w_v=w_v, b_v=b_v, w_o=w_o, b_o=b_o)


if __name__ == "__main__":
    # Small shapes consistent with the module.
    B, N = 2, 64
    z_dim, hidden_size, dim_embed_view, rgb_out_dim = 16, 32, 24, 16

    key = jax.random.PRNGKey(0)
    k_net, k_z, k_ray, k_params = jax.random.split(key, 4)

    net = jax.random.normal(k_net, (B, N, hidden_size), jnp.float32)
    z = jax.random.normal(k_z, (B, z_dim), jnp.float32)
    ray_d = jax.random.normal(k_ray, (B, N, dim_embed_view), jnp.float32)
    params = _init_params(k_params, z_dim, hidden_size, dim_embed_view, rgb_out_dim)

    # Callers should jit so the wrapper-side casts / bias-fold fuse instead of
    # running as separate eager HBM passes.
    fwd_f32 = jax.jit(functools.partial(
        feat_layers_forward,
        use_viewdirs=True, n_blocks_view=1, final_sigmoid_activation=True,
        compute_dtype=jnp.float32, out_dtype=jnp.float32))
    fwd_bf16 = jax.jit(functools.partial(
        feat_layers_forward,
        use_viewdirs=True, n_blocks_view=1, final_sigmoid_activation=True,
        compute_dtype=jnp.bfloat16, out_dtype=jnp.bfloat16))
    fwd_nv = jax.jit(functools.partial(
        feat_layers_forward,
        use_viewdirs=False, n_blocks_view=1, final_sigmoid_activation=True,
        compute_dtype=jnp.float32, out_dtype=jnp.float32))

    # 1) use_viewdirs + sigmoid, f32 MXU inputs / f32 output — strict correctness check.
    out_f32 = jax.block_until_ready(fwd_f32(net, z, ray_d, params))
    ref = _reference_forward(net, z, ray_d, params,
                             use_viewdirs=True, final_sigmoid_activation=True)
    assert out_f32.shape == (B, N, rgb_out_dim)
    assert jnp.allclose(out_f32, ref, atol=1e-5, rtol=1e-5), "f32 mismatch vs reference"

    # 2) same config, bf16 MXU inputs + bf16 output (f32 accumulation) — relaxed tolerance.
    out_bf16 = jax.block_until_ready(fwd_bf16(net, z, ray_d, params))
    assert out_bf16.shape == (B, N, rgb_out_dim)
    assert out_bf16.dtype == jnp.bfloat16
    assert jnp.allclose(out_bf16.astype(jnp.float32), ref, atol=5e-2, rtol=5e-2), \
        "bf16 mismatch vs reference"

    # 3) non-viewdirs path: ray_d / fc_view never passed to the kernel.
    out_nv = jax.block_until_ready(fwd_nv(net, z, None, params))
    ref_nv = _reference_forward(net, z, None, params,
                                use_viewdirs=False, final_sigmoid_activation=True)
    assert jnp.allclose(out_nv, ref_nv, atol=1e-5, rtol=1e-5), "no-viewdirs mismatch"

    print("KERNEL_OK")
</pallas_src>

<mosaic_0001>
module attributes {stable_mosaic.version = 11 : i64} {
  func.func @_feat_kernel(%arg0: i32, %arg1: i32, %arg2: memref<1x64x32xf32, #tpu.memory_space<vmem>>, %arg3: memref<1x64x24xf32, #tpu.memory_space<vmem>>, %arg4: memref<1x1x32xf32, #tpu.memory_space<vmem>>, %arg5: memref<32x32xf32, #tpu.memory_space<vmem>>, %arg6: memref<24x32xf32, #tpu.memory_space<vmem>>, %arg7: memref<32x16xf32, #tpu.memory_space<vmem>>, %arg8: memref<1x16xf32, #tpu.memory_space<vmem>>, %arg9: memref<1x64x16xf32, #tpu.memory_space<vmem>>) attributes {dimension_semantics = [#tpu.dimension_semantics<parallel>, #tpu.dimension_semantics<parallel>], iteration_bounds = array<i64: 2, 1>, scalar_prefetch = 0 : i64, scratch_operands = 0 : i64, tpu.core_type = #tpu.core_type<tc>, window_params = [{transform_indices = @transform_0, window_bounds = array<i64: 1, 64, 32>}, {transform_indices = @transform_1, window_bounds = array<i64: 1, 64, 24>}, {transform_indices = @transform_2, window_bounds = array<i64: 1, 1, 32>}, {pipeline_mode = #tpu.pipeline_mode<synchronous>, transform_indices = @transform_3, window_bounds = array<i64: 32, 32>}, {pipeline_mode = #tpu.pipeline_mode<synchronous>, transform_indices = @transform_4, window_bounds = array<i64: 24, 32>}, {pipeline_mode = #tpu.pipeline_mode<synchronous>, transform_indices = @transform_5, window_bounds = array<i64: 32, 16>}, {pipeline_mode = #tpu.pipeline_mode<synchronous>, transform_indices = @transform_6, window_bounds = array<i64: 1, 16>}, {transform_indices = @transform_7, window_bounds = array<i64: 1, 64, 16>}]} {
    %c0 = arith.constant 0 : index
    %c0_0 = arith.constant 0 : index
    %c0_1 = arith.constant 0 : index
    %0 = vector.load %arg2[%c0, %c0_0, %c0_1] : memref<1x64x32xf32, #tpu.memory_space<vmem>>, vector<1x64x32xf32>
    %1 = vector.shape_cast %0 : vector<1x64x32xf32> to vector<64x32xf32>
    %c0_2 = arith.constant 0 : index
    %c0_3 = arith.constant 0 : index
    %2 = vector.load %arg5[%c0_2, %c0_3] : memref<32x32xf32, #tpu.memory_space<vmem>>, vector<32x32xf32>
    %cst = arith.constant dense<0.000000e+00> : vector<64x32xf32>
    %3 = tpu.matmul %1, %2, %cst {dimension_numbers = #tpu.dot_dimension_numbers<[1], [0], [0], [1], [0, 0, 1, 1], [], []>} : vector<64x32xf32>, vector<32x32xf32>, vector<64x32xf32> -> vector<64x32xf32>
    %c0_4 = arith.constant 0 : index
    %c0_5 = arith.constant 0 : index
    %c0_6 = arith.constant 0 : index
    %4 = vector.load %arg3[%c0_4, %c0_5, %c0_6] : memref<1x64x24xf32, #tpu.memory_space<vmem>>, vector<1x64x24xf32>
    %5 = vector.shape_cast %4 : vector<1x64x24xf32> to vector<64x24xf32>
    %c0_7 = arith.constant 0 : index
    %c0_8 = arith.constant 0 : index
    %6 = vector.load %arg6[%c0_7, %c0_8] : memref<24x32xf32, #tpu.memory_space<vmem>>, vector<24x32xf32>
    %cst_9 = arith.constant dense<0.000000e+00> : vector<64x32xf32>
    %7 = tpu.matmul %5, %6, %cst_9 {dimension_numbers = #tpu.dot_dimension_numbers<[1], [0], [0], [1], [0, 0, 1, 1], [], []>} : vector<64x24xf32>, vector<24x32xf32>, vector<64x32xf32> -> vector<64x32xf32>
    %8 = arith.addf %3, %7 : vector<64x32xf32>
    %c0_10 = arith.constant 0 : index
    %c0_11 = arith.constant 0 : index
    %c0_12 = arith.constant 0 : index
    %9 = vector.load %arg4[%c0_10, %c0_11, %c0_12] : memref<1x1x32xf32, #tpu.memory_space<vmem>>, vector<1x1x32xf32>
    %10 = vector.shape_cast %9 : vector<1x1x32xf32> to vector<1x32xf32>
    %11 = vector.broadcast %10 : vector<1x32xf32> to vector<64x32xf32>
    %12 = arith.addf %8, %11 : vector<64x32xf32>
    %cst_13 = arith.constant 0.000000e+00 : f32
    %13 = vector.broadcast %cst_13 : f32 to vector<64x32xf32>
    %14 = arith.maximumf %12, %13 : vector<64x32xf32>
    %c0_14 = arith.constant 0 : index
    %c0_15 = arith.constant 0 : index
    %15 = vector.load %arg7[%c0_14, %c0_15] : memref<32x16xf32, #tpu.memory_space<vmem>>, vector<32x16xf32>
    %cst_16 = arith.constant dense<0.000000e+00> : vector<64x16xf32>
    %16 = tpu.matmul %14, %15, %cst_16 {dimension_numbers = #tpu.dot_dimension_numbers<[1], [0], [0], [1], [0, 0, 1, 1], [], []>} : vector<64x32xf32>, vector<32x16xf32>, vector<64x16xf32> -> vector<64x16xf32>
    %c0_17 = arith.constant 0 : index
    %c0_18 = arith.constant 0 : index
    %17 = vector.load %arg8[%c0_17, %c0_18] : memref<1x16xf32, #tpu.memory_space<vmem>>, vector<1x16xf32>
    %18 = vector.broadcast %17 : vector<1x16xf32> to vector<64x16xf32>
    %19 = arith.addf %16, %18 : vector<64x16xf32>
    %20 = arith.negf %19 : vector<64x16xf32>
    %21 = math.exp %20 : vector<64x16xf32>
    %cst_19 = arith.constant 1.000000e+00 : f32
    %22 = vector.broadcast %cst_19 : f32 to vector<64x16xf32>
    %23 = arith.addf %22, %21 : vector<64x16xf32>
    %24 = arith.divf %22, %23 : vector<64x16xf32>
    %c0_20 = arith.constant 0 : index
    %c0_21 = arith.constant 0 : index
    %c0_22 = arith.constant 0 : index
    %25 = vector.load %arg9[%c0_20, %c0_21, %c0_22] : memref<1x64x16xf32, #tpu.memory_space<vmem>>, vector<1x64x16xf32>
    %26 = vector.shape_cast %25 : vector<1x64x16xf32> to vector<64x16xf32>
    %27 = vector.shape_cast %24 : vector<64x16xf32> to vector<1x64x16xf32>
    tpu.vector_store %arg9[%c0_20, %c0_21, %c0_22], %27 {strides = array<i32>} : memref<1x64x16xf32, #tpu.memory_space<vmem>>, vector<1x64x16xf32>,
    return
  }
  func.func @transform_0(%arg0: i32, %arg1: i32) -> (i32, i32, i32) {
    %c0_i32 = arith.constant 0 : i32
    %c0_i32_0 = arith.constant 0 : i32
    return %arg0, %arg1, %c0_i32 : i32, i32, i32
  }
  func.func @transform_1(%arg0: i32, %arg1: i32) -> (i32, i32, i32) {
    %c0_i32 = arith.constant 0 : i32
    %c0_i32_0 = arith.constant 0 : i32
    return %arg0, %arg1, %c0_i32 : i32, i32, i32
  }
  func.func @transform_2(%arg0: i32, %arg1: i32) -> (i32, i32, i32) {
    %c0_i32 = arith.constant 0 : i32
    %c0_i32_0 = arith.constant 0 : i32
    %c0_i32_1 = arith.constant 0 : i32
    return %arg0, %c0_i32, %c0_i32_0 : i32, i32, i32
  }
  func.func @transform_3(%arg0: i32, %arg1: i32) -> (i32, i32) {
    %c0_i32 = arith.constant 0 : i32
    %c0_i32_0 = arith.constant 0 : i32
    %c0_i32_1 = arith.constant 0 : i32
    return %c0_i32, %c0_i32_0 : i32, i32
  }
  func.func @transform_4(%arg0: i32, %arg1: i32) -> (i32, i32) {
    %c0_i32 = arith.constant 0 : i32
    %c0_i32_0 = arith.constant 0 : i32
    %c0_i32_1 = arith.constant 0 : i32
    return %c0_i32, %c0_i32_0 : i32, i32
  }
  func.func @transform_5(%arg0: i32, %arg1: i32) -> (i32, i32) {
    %c0_i32 = arith.constant 0 : i32
    %c0_i32_0 = arith.constant 0 : i32
    %c0_i32_1 = arith.constant 0 : i32
    return %c0_i32, %c0_i32_0 : i32, i32
  }
  func.func @transform_6(%arg0: i32, %arg1: i32) -> (i32, i32) {
    %c0_i32 = arith.constant 0 : i32
    %c0_i32_0 = arith.constant 0 : i32
    %c0_i32_1 = arith.constant 0 : i32
    return %c0_i32, %c0_i32_0 : i32, i32
  }
  func.func @transform_7(%arg0: i32, %arg1: i32) -> (i32, i32, i32) {
    %c0_i32 = arith.constant 0 : i32
    %c0_i32_0 = arith.constant 0 : i32
    return %arg0, %arg1, %c0_i32 : i32, i32, i32
  }
}

</mosaic_0001>

<llo_original>
// kernel: feat_layers_forward.1
$region0: #{feat_layers_forward.1}
  #allocation0 [shape = 'u32[]', space=smem, size = 0x4, offset = 0x4, fixed_abs, tag = 'smem constant byte address 0x4 - core index']
  #allocation1 [shape = 'u32[144,128]{1,0:T(1,128)}', space=vmem, size = 0x12000, scoped, tag = 'internal scratch']
  %s0 = inlined_call_operand.vmem [shape: f32[2,64,32], index: 0, kind: input, shape index: {}]
  %s1 = inlined_call_operand.vmem [shape: f32[2,64,24], index: 1, kind: input, shape index: {}]
  %s2 = inlined_call_operand.vmem [shape: f32[2,1,32], index: 2, kind: input, shape index: {}]
  %s3 = inlined_call_operand.vmem [shape: f32[32,32], index: 3, kind: input, shape index: {}]
  %s4 = inlined_call_operand.vmem [shape: f32[24,32], index: 4, kind: input, shape index: {}]
  %s5 = inlined_call_operand.vmem [shape: f32[32,16], index: 5, kind: input, shape index: {}]
  %s6 = inlined_call_operand.vmem [shape: f32[1,16], index: 6, kind: input, shape index: {}]
  %s7 = inlined_call_operand.vmem [shape: f32[2,64,16], index: 7, kind: output, shape index: {}]
  %s8 = sld [smem:[#allocation0]]
  $region61: #{feat_layers_forward.1} parent=0
    _
  %s10 = ssub.s32 1, %s8
  %s11 = scalar_select 0, %s10, %s8
  loop: start=0, step=1, limit=4
  $region2: #{feat_layers_forward.1} parent=0 // loop_pre_header
    _
  $region3: #{feat_layers_forward.1} parent=0 // loop_header
    %s13 = sphi 0, %s17
    %p14 = scmp.ge.s32.totalorder %s13, 4
    %s20 = sphi 0, %s32
    %s21 = sphi 0, %s28
    %s22 = sphi 0, %s20
    %s23 = sphi 0, %s21
    %s24 = sphi 0, %s22
    %s25 = sphi 0, %s23
    %s37 = sphi 0, %s39
    %s40 = sphi 0, %s37
    %s41 = sphi 0, %s40
    %s57 = sphi 0, %s41
    %s65 = sphi 0, %s67
    %s68 = sphi 0, %s65
    %s69 = sphi 0, %s68
    %s85 = sphi 0, %s69
    %s91 = sphi 0, %s93
    %s94 = sphi 0, %s91
    %s95 = sphi 0, %s94
    %s111 = sphi 0, %s95
    %s115 = sphi 0, %s115
    %s117 = sphi 0, %s115
    %s118 = sphi 0, %s117
    %s132 = sphi 0, %s118
    %s136 = sphi 0, %s136
    %s138 = sphi 0, %s136
    %s139 = sphi 0, %s138
    %s153 = sphi 0, %s139
    %s157 = sphi 0, %s157
    %s159 = sphi 0, %s157
    %s160 = sphi 0, %s159
    %s174 = sphi 0, %s160
    %s178 = sphi 0, %s178
    %s180 = sphi 0, %s178
    %s181 = sphi 0, %s180
    %s195 = sphi 0, %s181
    %s203 = sphi 0, %s205
    %s206 = sphi 0, %s203
    %s207 = sphi 0, %s206
    %s223 = sphi 0, %s207
  $region4: #{feat_layers_forward.1} parent=0 // loop_header_branch
    %16 = sbr.rel (%p14) target = $region8
  $region5: #{feat_layers_forward.1} parent=0 // loop_body
    %s18 = ssub.s32 %s13, 1
    %s19 = ssub.s32 %s13, 2
    %s26 = sadd.s32 1, %s21
    %p27 = scmp.ge.s32.totalorder %s26, 1
    %s28 = scalar_select %p27, 0, %s26
    %s29 = sadd.s32 1, %s20
    %s30 = scalar_select %p27, %s29, %s20
    %p31 = scmp.ge.s32.totalorder %s30, 2
    %s32 = scalar_select %p31, 0, %s30
    %s33 = ssub.s32 %s20, %s32
    %s34 = ssub.s32 %s21, %s28
    %s35 = sor.u32 %s33, %s34
    %p36 = scmp.eq.s32.totalorder %s35, 0
    %s38 = sadd.s32 %s37, 1
    %s39 = scalar_select %p36, %s37, %s38
    %p42 = pneg %p36
    %p43 = scmp.eq.s32.totalorder %s13, 1
    %p44 = por %p42, %p43
    %p45 = scmp.ne.s32.totalorder %s37, %s40
    %p46 = scmp.eq.s32.totalorder %s13, 0
    %p47 = por %p45, %p46
    %p48 = scmp.ne.s32.totalorder %s37, %s40
    %p49 = scmp.eq.s32.totalorder %s18, 1
    %p50 = por %p48, %p49
    %p51 = scmp.ne.s32.totalorder %s40, %s41
    %p52 = scmp.eq.s32.totalorder %s18, 0
    %p53 = por %p51, %p52
    %p54 = scmp.ne.s32.totalorder %s40, %s41
    %p55 = scmp.eq.s32.totalorder %s19, 1
    %p56 = por %p54, %p55
    %p58 = scmp.ne.s32.totalorder %s41, %s57
    %p59 = scmp.eq.s32.totalorder %s19, 0
    %p60 = por %p58, %p59
    %s61 = ssub.s32 %s20, %s32
    %s62 = ssub.s32 %s21, %s28
    %s63 = sor.u32 %s61, %s62
    %p64 = scmp.eq.s32.totalorder %s63, 0
    %s66 = sadd.s32 %s65, 1
    %s67 = scalar_select %p64, %s65, %s66
    %p70 = pneg %p64
    %p71 = scmp.eq.s32.totalorder %s13, 1
    %p72 = por %p70, %p71
    %p73 = scmp.ne.s32.totalorder %s65, %s68
    %p74 = scmp.eq.s32.totalorder %s13, 0
    %p75 = por %p73, %p74
    %p76 = scmp.ne.s32.totalorder %s65, %s68
    %p77 = scmp.eq.s32.totalorder %s18, 1
    %p78 = por %p76, %p77
    %p79 = scmp.ne.s32.totalorder %s68, %s69
    %p80 = scmp.eq.s32.totalorder %s18, 0
    %p81 = por %p79, %p80
    %p82 = scmp.ne.s32.totalorder %s68, %s69
    %p83 = scmp.eq.s32.totalorder %s19, 1
    %p84 = por %p82, %p83
    %p86 = scmp.ne.s32.totalorder %s69, %s85
    %p87 = scmp.eq.s32.totalorder %s19, 0
    %p88 = por %p86, %p87
    %s89 = ssub.s32 %s20, %s32
    %p90 = scmp.eq.s32.totalorder %s89, 0
    %s92 = sadd.s32 %s91, 1
    %s93 = scalar_select %p90, %s91, %s92
    %p96 = pneg %p90
    %p97 = scmp.eq.s32.totalorder %s13, 1
    %p98 = por %p96, %p97
    %p99 = scmp.ne.s32.totalorder %s91, %s94
    %p100 = scmp.eq.s32.totalorder %s13, 0
    %p101 = por %p99, %p100
    %p102 = scmp.ne.s32.totalorder %s91, %s94
    %p103 = scmp.eq.s32.totalorder %s18, 1
    %p104 = por %p102, %p103
    %p105 = scmp.ne.s32.totalorder %s94, %s95
    %p106 = scmp.eq.s32.totalorder %s18, 0
    %p107 = por %p105, %p106
    %p108 = scmp.ne.s32.totalorder %s94, %s95
    %p109 = scmp.eq.s32.totalorder %s19, 1
    %p110 = por %p108, %p109
    %p112 = scmp.ne.s32.totalorder %s95, %s111
    %p113 = scmp.eq.s32.totalorder %s19, 0
    %p114 = por %p112, %p113
    %s116 = sadd.s32 %s115, 1
    %p119 = scmp.eq.s32.totalorder %s13, 1
    %p120 = scmp.ne.s32.totalorder %s115, %s117
    %p121 = scmp.eq.s32.totalorder %s13, 0
    %p122 = por %p120, %p121
    %p123 = scmp.ne.s32.totalorder %s115, %s117
    %p124 = scmp.eq.s32.totalorder %s18, 1
    %p125 = por %p123, %p124
    %p126 = scmp.ne.s32.totalorder %s117, %s118
    %p127 = scmp.eq.s32.totalorder %s18, 0
    %p128 = por %p126, %p127
    %p129 = scmp.ne.s32.totalorder %s117, %s118
    %p130 = scmp.eq.s32.totalorder %s19, 1
    %p131 = por %p129, %p130
    %p133 = scmp.ne.s32.totalorder %s118, %s132
    %p134 = scmp.eq.s32.totalorder %s19, 0
    %p135 = por %p133, %p134
    %s137 = sadd.s32 %s136, 1
    %p140 = scmp.eq.s32.totalorder %s13, 1
    %p141 = scmp.ne.s32.totalorder %s136, %s138
    %p142 = scmp.eq.s32.totalorder %s13, 0
    %p143 = por %p141, %p142
    %p144 = scmp.ne.s32.totalorder %s136, %s138
    %p145 = scmp.eq.s32.totalorder %s18, 1
    %p146 = por %p144, %p145
    %p147 = scmp.ne.s32.totalorder %s138, %s139
    %p148 = scmp.eq.s32.totalorder %s18, 0
    %p149 = por %p147, %p148
    %p150 = scmp.ne.s32.totalorder %s138, %s139
    %p151 = scmp.eq.s32.totalorder %s19, 1
    %p152 = por %p150, %p151
    %p154 = scmp.ne.s32.totalorder %s139, %s153
    %p155 = scmp.eq.s32.totalorder %s19, 0
    %p156 = por %p154, %p155
    %s158 = sadd.s32 %s157, 1
    %p161 = scmp.eq.s32.totalorder %s13, 1
    %p162 = scmp.ne.s32.totalorder %s157, %s159
    %p163 = scmp.eq.s32.totalorder %s13, 0
    %p164 = por %p162, %p163
    %p165 = scmp.ne.s32.totalorder %s157, %s159
    %p166 = scmp.eq.s32.totalorder %s18, 1
    %p167 = por %p165, %p166
    %p168 = scmp.ne.s32.totalorder %s159, %s160
    %p169 = scmp.eq.s32.totalorder %s18, 0
    %p170 = por %p168, %p169
    %p171 = scmp.ne.s32.totalorder %s159, %s160
    %p172 = scmp.eq.s32.totalorder %s19, 1
    %p173 = por %p171, %p172
    %p175 = scmp.ne.s32.totalorder %s160, %s174
    %p176 = scmp.eq.s32.totalorder %s19, 0
    %p177 = por %p175, %p176
    %s179 = sadd.s32 %s178, 1
    %p182 = scmp.eq.s32.totalorder %s13, 1
    %p183 = scmp.ne.s32.totalorder %s178, %s180
    %p184 = scmp.eq.s32.totalorder %s13, 0
    %p185 = por %p183, %p184
    %p186 = scmp.ne.s32.totalorder %s178, %s180
    %p187 = scmp.eq.s32.totalorder %s18, 1
    %p188 = por %p186, %p187
    %p189 = scmp.ne.s32.totalorder %s180, %s181
    %p190 = scmp.eq.s32.totalorder %s18, 0
    %p191 = por %p189, %p190
    %p192 = scmp.ne.s32.totalorder %s180, %s181
    %p193 = scmp.eq.s32.totalorder %s19, 1
    %p194 = por %p192, %p193
    %p196 = scmp.ne.s32.totalorder %s181, %s195
    %p197 = scmp.eq.s32.totalorder %s19, 0
    %p198 = por %p196, %p197
    %s199 = ssub.s32 %s20, %s32
    %s200 = ssub.s32 %s21, %s28
    %s201 = sor.u32 %s199, %s200
    %p202 = scmp.eq.s32.totalorder %s201, 0
    %s204 = sadd.s32 %s203, 1
    %s205 = scalar_select %p202, %s203, %s204
    %p208 = pneg %p202
    %p209 = scmp.eq.s32.totalorder %s13, 1
    %p210 = por %p208, %p209
    %p211 = scmp.ne.s32.totalorder %s203, %s206
    %p212 = scmp.eq.s32.totalorder %s13, 0
    %p213 = por %p211, %p212
    %p214 = scmp.ne.s32.totalorder %s203, %s206
    %p215 = scmp.eq.s32.totalorder %s18, 1
    %p216 = por %p214, %p215
    %p217 = scmp.ne.s32.totalorder %s206, %s207
    %p218 = scmp.eq.s32.totalorder %s18, 0
    %p219 = por %p217, %p218
    %p220 = scmp.ne.s32.totalorder %s206, %s207
    %p221 = scmp.eq.s32.totalorder %s19, 1
    %p222 = por %p220, %p221
    %p224 = scmp.ne.s32.totalorder %s207, %s223
    %p225 = scmp.eq.s32.totalorder %s19, 0
    %p226 = por %p224, %p225
    %p227 = scmp.le.s32.totalorder 1, %s13
    %p228 = scmp.lt.s32.totalorder %s13, 3
    %p229 = pnand %p227, %p228
    %p230 = pneg %p229
    // Predicated region
    $region9: #{feat_layers_forward.1} parent=5 // pred_check
      _
    $region10: #{feat_layers_forward.1} parent=5 // pred_check_branch
      %232 = sbr.rel (%p229) target = $region12
    $region11: #{feat_layers_forward.1} parent=5 // pred_region
      %s233 = ssub.s32 %s13, 1
      // Predicated region
      $region13: #{feat_layers_forward.1} parent=11 // pred_check
        %p234 = pneg %p128
      $region14: #{feat_layers_forward.1} parent=11 // pred_check_branch
        %236 = sbr.rel (%p234) target = $region16
      $region15: #{feat_layers_forward.1} parent=11 // pred_region
        _
      $region16: #{feat_layers_forward.1} parent=11 // pred_fallthru
        _
      // Predicated region
      $region17: #{feat_layers_forward.1} parent=11 // pred_check
        %p237 = pneg %p149
      $region18: #{feat_layers_forward.1} parent=11 // pred_check_branch
        %239 = sbr.rel (%p237) target = $region20
      $region19: #{feat_layers_forward.1} parent=11 // pred_region
        _
      $region20: #{feat_layers_forward.1} parent=11 // pred_fallthru
        _
      // Predicated region
      $region21: #{feat_layers_forward.1} parent=11 // pred_check
        %p240 = pneg %p170
      $region22: #{feat_layers_forward.1} parent=11 // pred_check_branch
        %242 = sbr.rel (%p240) target = $region24
      $region23: #{feat_layers_forward.1} parent=11 // pred_region
        _
      $region24: #{feat_layers_forward.1} parent=11 // pred_fallthru
        _
      // Predicated region
      $region25: #{feat_layers_forward.1} parent=11 // pred_check
        %p243 = pneg %p191
      $region26: #{feat_layers_forward.1} parent=11 // pred_check_branch
        %245 = sbr.rel (%p243) target = $region28
      $region27: #{feat_layers_forward.1} parent=11 // pred_region
        _
      $region28: #{feat_layers_forward.1} parent=11 // pred_fallthru
        _
    $region12: #{feat_layers_forward.1} parent=5 // pred_fallthru
      _
    %p246 = scmp.lt.s32.totalorder %s13, 2
    // Predicated region
    $region29: #{feat_layers_forward.1} parent=5 // pred_check
      %p247 = pneg %p246
    $region30: #{feat_layers_forward.1} parent=5 // pred_check_branch
      %249 = sbr.rel (%p247) target = $region32
    $region31: #{feat_layers_forward.1} parent=5 // pred_region
      // Predicated region
      $region33: #{feat_layers_forward.1} parent=31 // pred_check
        %p250 = pneg %p47
      $region34: #{feat_layers_forward.1} parent=31 // pred_check_branch
        %252 = sbr.rel (%p250) target = $region36
      $region35: #{feat_layers_forward.1} parent=31 // pred_region
        %s253 = smul.u32 8, %s21
        %p254 = scmp.lt.s32.totalorder %s20, 1
        %s255 = scalar_select %p254, %s20, 1
        %p256 = scmp.lt.s32.totalorder %s253, 7
        %s257 = scalar_select %p256, %s253, 7
        %s258 = smul.addr %s255, 8
        %s259 = sadd.s32 %s257, %s258
        %s260 = smul.addr %s259, 8
        %s261 = scalar_lea.vmem %s0, %s260
        %s262 = smul.u32 8, %s21
      $region36: #{feat_layers_forward.1} parent=31 // pred_fallthru
        _
      // Predicated region
      $region37: #{feat_layers_forward.1} parent=31 // pred_check
        %p263 = pneg %p75
      $region38: #{feat_layers_forward.1} parent=31 // pred_check_branch
        %265 = sbr.rel (%p263) target = $region40
      $region39: #{feat_layers_forward.1} parent=31 // pred_region
        %s266 = smul.u32 8, %s21
        %p267 = scmp.lt.s32.totalorder %s20, 1
        %s268 = scalar_select %p267, %s20, 1
        %p269 = scmp.lt.s32.totalorder %s266, 7
        %s270 = scalar_select %p269, %s266, 7
        %s271 = smul.addr %s268, 8
        %s272 = sadd.s32 %s270, %s271
        %s273 = smul.addr %s272, 8
        %s274 = scalar_lea.vmem %s1, %s273
        %s275 = smul.u32 8, %s21
      $region40: #{feat_layers_forward.1} parent=31 // pred_fallthru
        _
      // Predicated region
      $region41: #{feat_layers_forward.1} parent=31 // pred_check
        %p276 = pneg %p101
      $region42: #{feat_layers_forward.1} parent=31 // pred_check_branch
        %278 = sbr.rel (%p276) target = $region44
      $region43: #{feat_layers_forward.1} parent=31 // pred_region
        %p279 = scmp.lt.s32.totalorder %s20, 1
        %s280 = scalar_select %p279, %s20, 1
        %s281 = scalar_lea.vmem %s2, %s280
      $region44: #{feat_layers_forward.1} parent=31 // pred_fallthru
        _
    $region32: #{feat_layers_forward.1} parent=5 // pred_fallthru
      _
    %p282 = scmp.le.s32.totalorder 1, %s13
    %p283 = scmp.lt.s32.totalorder %s13, 3
    %p284 = pnand %p282, %p283
    %p285 = pneg %p284
    // Predicated region
    $region45: #{feat_layers_forward.1} parent=5 // pred_check
      _
    $region46: #{feat_layers_forward.1} parent=5 // pred_check_branch
      %287 = sbr.rel (%p284) target = $region48
    $region47: #{feat_layers_forward.1} parent=5 // pred_region
      %s288 = ssub.s32 %s13, 1
      %s289 = smul.u32 8, %s23
      %p290 = scmp.lt.s32.totalorder %s22, 1
      %s291 = scalar_select %p290, %s22, 1
      %p292 = scmp.lt.s32.totalorder %s289, 7
      %s293 = scalar_select %p292, %s289, 7
      %s294 = smul.addr %s291, 8
      %s295 = sadd.s32 %s293, %s294
      %s296 = smul.addr %s295, 8
      %s297 = scalar_lea.vmem %s0, %s296
      %p298 = pneg %p53
      %p299 = pneg %p50
      %s300 = smul.u32 8, %s23
      %p301 = scmp.lt.s32.totalorder %s22, 1
      %s302 = scalar_select %p301, %s22, 1
      %p303 = scmp.lt.s32.totalorder %s300, 7
      %s304 = scalar_select %p303, %s300, 7
      %s305 = smul.addr %s302, 8
      %s306 = sadd.s32 %s304, %s305
      %s307 = smul.addr %s306, 8
      %s308 = scalar_lea.vmem %s1, %s307
      %p309 = pneg %p81
      %p310 = pneg %p78
      %p311 = scmp.lt.s32.totalorder %s22, 1
      %s312 = scalar_select %p311, %s22, 1
      %s313 = scalar_lea.vmem %s2, %s312
      %p314 = pneg %p107
      %p315 = pneg %p104
      %p316 = pneg %p128
      %p317 = pneg %p125
      %p318 = pneg %p149
      %p319 = pneg %p146
      %p320 = pneg %p170
      %p321 = pneg %p167
      %p322 = pneg %p191
      %p323 = pneg %p188
      %p324 = pneg %p219
      %p325 = pneg %p216
      %s326 = smul.u32 8, %s23
      %p327 = scmp.lt.s32.totalorder %s22, 1
      %s328 = scalar_select %p327, %s22, 1
      %p329 = scmp.lt.s32.totalorder %s326, 7
      %s330 = scalar_select %p329, %s326, 7
      %s331 = smul.addr %s328, 8
      %s332 = sadd.s32 %s330, %s331
      %s333 = smul.addr %s332, 8
      %s334 = scalar_lea.vmem %s7, %s333
      %s335 = smul.u32 8, %s23
      %p336 = scmp.lt.s32.totalorder %s22, 1
      %s337 = scalar_select %p336, %s22, 1
      %p338 = scmp.lt.s32.totalorder %s335, 7
      %s339 = scalar_select %p338, %s335, 7
      %s340 = smul.addr %s337, 8
      %s341 = sadd.s32 %s339, %s340
      %s342 = smul.addr %s341, 8
      %s343 = scalar_lea.vmem %s0, %s342
      %s344 = smul.u32 8, %s23
      %s345 = smul.u32 8, %s23
      %p346 = scmp.lt.s32.totalorder %s22, 1
      %s347 = scalar_select %p346, %s22, 1
      %p348 = scmp.lt.s32.totalorder %s345, 7
      %s349 = scalar_select %p348, %s345, 7
      %s350 = smul.addr %s347, 8
      %s351 = sadd.s32 %s349, %s350
      %s352 = smul.addr %s351, 8
      %s353 = scalar_lea.vmem %s1, %s352
      %s354 = smul.u32 8, %s23
      %p355 = scmp.lt.s32.totalorder %s22, 1
      %s356 = scalar_select %p355, %s22, 1
      %s357 = scalar_lea.vmem %s2, %s356
      %s358 = smul.u32 8, %s23
      %p359 = scmp.lt.s32.totalorder %s22, 1
      %s360 = scalar_select %p359, %s22, 1
      %p361 = scmp.lt.s32.totalorder %s358, 7
      %s362 = scalar_select %p361, %s358, 7
      %s363 = smul.addr %s360, 8
      %s364 = sadd.s32 %s362, %s363
      %s365 = smul.addr %s364, 8
      %s366 = scalar_lea.vmem %s7, %s365
      %s367 = smul.u32 8, %s23
      %v368 = vld [vmem:[%s343] sm:$0xff]
      %v369 = vld [vmem:[%s343 + $0x8] sm:$0xff]
      %v370 = vld [vmem:[%s343 + $0x10] sm:$0xff]
      %v371 = vld [vmem:[%s343 + $0x18] sm:$0xff]
      %v372 = vld [vmem:[%s343 + $0x20] sm:$0xff]
      %v373 = vld [vmem:[%s343 + $0x28] sm:$0xff]
      %v374 = vld [vmem:[%s343 + $0x30] sm:$0xff]
      %v375 = vld [vmem:[%s343 + $0x38] sm:$0xff]
      %v376 = vld [vmem:[%s3] sm:$0xff]
      %v377 = vld [vmem:[%s3 + $0x8] sm:$0xff]
      %v378 = vld [vmem:[%s3 + $0x10] sm:$0xff]
      %v379 = vld [vmem:[%s3 + $0x18] sm:$0xff]
      %v380 = vld [vmem:[%s353] sm:$0xff]
      %v381 = vld [vmem:[%s353 + $0x8] sm:$0xff]
      %v382 = vld [vmem:[%s353 + $0x10] sm:$0xff]
      %v383 = vld [vmem:[%s353 + $0x18] sm:$0xff]
      %v384 = vld [vmem:[%s353 + $0x20] sm:$0xff]
      %v385 = vld [vmem:[%s353 + $0x28] sm:$0xff]
      %v386 = vld [vmem:[%s353 + $0x30] sm:$0xff]
      %v387 = vld [vmem:[%s353 + $0x38] sm:$0xff]
      %v388 = vld [vmem:[%s4] sm:$0xff]
      %v389 = vld [vmem:[%s4 + $0x8] sm:$0xff]
      %v390 = vld [vmem:[%s4 + $0x10] sm:$0xff]
      %vm391 = vcmask 195584
      %v393 = vsel %vm391, %v380, 0
      %v396 = vsel %vm391, %v381, 0
      %v399 = vsel %vm391, %v382, 0
      %v402 = vsel %vm391, %v383, 0
      %v405 = vsel %vm391, %v384, 0
      %v408 = vsel %vm391, %v385, 0
      %v411 = vsel %vm391, %v386, 0
      %v414 = vsel %vm391, %v387, 0
      %416 = vmatprep.subr.mxu0 0.0
      %417 = vmatpush1.msra.mxu0 %v388
      %418 = vmatprep.subr.mxu0 0.0
      %419 = vmatpush1.msra.mxu0 %v389
      %420 = vmatprep.subr.mxu0 0.0
      %421 = vmatpush1.msra.mxu0 %v390
      %422 = vmatprep.subr.mxu0 0.0
      %423 = vmatpush1.msra.mxu0 0.0
      %424 = vmatprep.subr.mxu0 0.0
      %425 = vmatpush1.msra.mxu0 0.0
      %426 = vmatprep.subr.mxu0 0.0
      %427 = vmatpush1.msra.mxu0 0.0
      %428 = vmatprep.subr.mxu0 0.0
      %429 = vmatpush1.msra.mxu0 0.0
      %430 = vmatprep.subr.mxu0 0.0
      %431 = vmatpush1.msra.mxu0 0.0
      %432 = vmatprep.subr.mxu0 0.0
      %433 = vmatpush1.msra.mxu0 0.0
      %434 = vmatprep.subr.mxu0 0.0
      %435 = vmatpush1.msra.mxu0 0.0
      %436 = vmatprep.subr.mxu0 0.0
      %437 = vmatpush1.msra.mxu0 0.0
      %438 = vmatprep.subr.mxu0 0.0
      %439 = vmatpush1.msra.mxu0 0.0
      %440 = vmatprep.subr.mxu0 0.0
      %441 = vmatpush1.msra.mxu0 0.0
      %442 = vmatprep.subr.mxu0 0.0
      %443 = vmatpush1.msra.mxu0 0.0
      %444 = vmatprep.subr.mxu0 0.0
      %445 = vmatpush1.msra.mxu0 0.0
      %446 = vmatprep.subr.mxu0 0.0
      %447 = vmatpush1.msra.mxu0 0.0
      %448 = vmatprep.subr.mxu0 0.0
      %449 = vmatpush1.msra.mxu0 0.0
      %450 = vmatprep.subr.mxu0 0.0
      %451 = vmatpush1.msra.mxu0 0.0
      %452 = vmatprep.subr.mxu0 0.0
      %453 = vmatpush1.msra.mxu0 0.0
      %454 = vmatprep.subr.mxu0 0.0
      %455 = vmatpush1.msra.mxu0 0.0
      %456 = vmatprep.subr.mxu0 0.0
      %457 = vmatpush1.msra.mxu0 0.0
      %458 = vmatprep.subr.mxu0 0.0
      %459 = vmatpush1.msra.mxu0 0.0
      %460 = vmatprep.subr.mxu0 0.0
      %461 = vmatpush1.msra.mxu0 0.0
      %462 = vmatprep.subr.mxu0 0.0
      %463 = vmatpush1.msra.mxu0 0.0
      %464 = vmatprep.subr.mxu0 0.0
      %465 = vmatpush1.msra.mxu0 0.0
      %466 = vmatprep.subr.mxu0 0.0
      %467 = vmatpush1.msra.mxu0 0.0
      %468 = vmatprep.subr.mxu0 0.0
      %469 = vmatpush1.msra.mxu0 0.0
      %470 = vmatprep.subr.mxu0 0.0
      %471 = vmatpush1.msra.mxu0 0.0
      %472 = vmatprep.subr.mxu0 0.0
      %473 = vmatpush1.msra.mxu0 0.0
      %474 = vmatprep.subr.mxu0 0.0
      %475 = vmatpush1.msra.mxu0 0.0
      %476 = vmatprep.subr.mxu0 0.0
      %477 = vmatpush1.msra.mxu0 0.0
      %478 = vmatprep.subr.mxu0 0.0
      %479 = vmatpush1.msra.mxu0 0.0
      %480 = vmatprep.mubr.f32.mxu0 0.0
      %481 = vmatmul.mubr.f32.gmra.mrb[0].mxu0 %v393
      %v482 = vpop.f32.mrb[0].mxu0
      %v483 = vadd.f32 0.0, %v482
      %v484 = vpop.f32.mrb[0].mxu0
      %485 = vmatprep.mubr.f32.mxu0 0.0
      %486 = vmatmul.mubr.f32.gmra.mrb[0].mxu0 %v396
      %v487 = vpop.f32.mrb[0].mxu0
      %v488 = vadd.f32 0.0, %v487
      %v489 = vpop.f32.mrb[0].mxu0
      %490 = vmatprep.mubr.f32.mxu0 0.0
      %491 = vmatmul.mubr.f32.gmra.mrb[0].mxu0 %v399
      %v492 = vpop.f32.mrb[0].mxu0
      %v493 = vadd.f32 0.0, %v492
      %v494 = vpop.f32.mrb[0].mxu0
      %495 = vmatprep.mubr.f32.mxu0 0.0
      %496 = vmatmul.mubr.f32.gmra.mrb[0].mxu0 %v402
      %v497 = vpop.f32.mrb[0].mxu0
      %v498 = vadd.f32 0.0, %v497
      %v499 = vpop.f32.mrb[0].mxu0
      %500 = vmatprep.mubr.f32.mxu0 0.0
      %501 = vmatmul.mubr.f32.gmra.mrb[0].mxu0 %v405
      %v502 = vpop.f32.mrb[0].mxu0
      %v503 = vadd.f32 0.0, %v502
      %v504 = vpop.f32.mrb[0].mxu0
      %505 = vmatprep.mubr.f32.mxu0 0.0
      %506 = vmatmul.mubr.f32.gmra.mrb[0].mxu0 %v408
      %v507 = vpop.f32.mrb[0].mxu0
      %v508 = vadd.f32 0.0, %v507
      %v509 = vpop.f32.mrb[0].mxu0
      %510 = vmatprep.mubr.f32.mxu0 0.0
      %511 = vmatmul.mubr.f32.gmra.mrb[0].mxu0 %v411
      %v512 = vpop.f32.mrb[0].mxu0
      %v513 = vadd.f32 0.0, %v512
      %v514 = vpop.f32.mrb[0].mxu0
      %515 = vmatprep.mubr.f32.mxu0 0.0
      %516 = vmatmul.mubr.f32.gmra.mrb[0].mxu0 %v414
      %v517 = vpop.f32.mrb[0].mxu0
      %v518 = vadd.f32 0.0, %v517
      %v519 = vpop.f32.mrb[0].mxu0
      %520 = vdwg.mxu0
      %vm521 = vcmask 261120
      %v523 = vsel %vm521, %v368, 0
      %v526 = vsel %vm521, %v369, 0
      %v529 = vsel %vm521, %v370, 0
      %v532 = vsel %vm521, %v371, 0
      %v535 = vsel %vm521, %v372, 0
      %v538 = vsel %vm521, %v373, 0
      %v541 = vsel %vm521, %v374, 0
      %v544 = vsel %vm521, %v375, 0
      %546 = vmatprep.subr.mxu0 0.0
      %547 = vmatpush1.msra.mxu0 %v376
      %548 = vmatprep.subr.mxu0 0.0
      %549 = vmatpush1.msra.mxu0 %v377
      %550 = vmatprep.subr.mxu0 0.0
      %551 = vmatpush1.msra.mxu0 %v378
      %552 = vmatprep.subr.mxu0 0.0
      %553 = vmatpush1.msra.mxu0 %v379
      %554 = vmatprep.subr.mxu0 0.0
      %555 = vmatpush1.msra.mxu0 0.0
      %556 = vmatprep.subr.mxu0 0.0
      %557 = vmatpush1.msra.mxu0 0.0
      %558 = vmatprep.subr.mxu0 0.0
      %559 = vmatpush1.msra.mxu0 0.0
      %560 = vmatprep.subr.mxu0 0.0
      %561 = vmatpush1.msra.mxu0 0.0
      %562 = vmatprep.subr.mxu0 0.0
      %563 = vmatpush1.msra.mxu0 0.0
      %564 = vmatprep.subr.mxu0 0.0
      %565 = vmatpush1.msra.mxu0 0.0
      %566 = vmatprep.subr.mxu0 0.0
      %567 = vmatpush1.msra.mxu0 0.0
      %568 = vmatprep.subr.mxu0 0.0
      %569 = vmatpush1.msra.mxu0 0.0
      %570 = vmatprep.subr.mxu0 0.0
      %571 = vmatpush1.msra.mxu0 0.0
      %572 = vmatprep.subr.mxu0 0.0
      %573 = vmatpush1.msra.mxu0 0.0
      %574 = vmatprep.subr.mxu0 0.0
      %575 = vmatpush1.msra.mxu0 0.0
      %576 = vmatprep.subr.mxu0 0.0
      %577 = vmatpush1.msra.mxu0 0.0
      %578 = vmatprep.subr.mxu0 0.0
      %579 = vmatpush1.msra.mxu0 0.0
      %580 = vmatprep.subr.mxu0 0.0
      %581 = vmatpush1.msra.mxu0 0.0
      %582 = vmatprep.subr.mxu0 0.0
      %583 = vmatpush1.msra.mxu0 0.0
      %584 = vmatprep.subr.mxu0 0.0
      %585 = vmatpush1.msra.mxu0 0.0
      %586 = vmatprep.subr.mxu0 0.0
      %587 = vmatpush1.msra.mxu0 0.0
      %588 = vmatprep.subr.mxu0 0.0
      %589 = vmatpush1.msra.mxu0 0.0
      %590 = vmatprep.subr.mxu0 0.0
      %591 = vmatpush1.msra.mxu0 0.0
      %592 = vmatprep.subr.mxu0 0.0
      %593 = vmatpush1.msra.mxu0 0.0
      %594 = vmatprep.subr.mxu0 0.0
      %595 = vmatpush1.msra.mxu0 0.0
      %596 = vmatprep.subr.mxu0 0.0
      %597 = vmatpush1.msra.mxu0 0.0
      %598 = vmatprep.subr.mxu0 0.0
      %599 = vmatpush1.msra.mxu0 0.0
      %600 = vmatprep.subr.mxu0 0.0
      %601 = vmatpush1.msra.mxu0 0.0
      %602 = vmatprep.subr.mxu0 0.0
      %603 = vmatpush1.msra.mxu0 0.0
      %604 = vmatprep.subr.mxu0 0.0
      %605 = vmatpush1.msra.mxu0 0.0
      %606 = vmatprep.subr.mxu0 0.0
      %607 = vmatpush1.msra.mxu0 0.0
      %608 = vmatprep.subr.mxu0 0.0
      %609 = vmatpush1.msra.mxu0 0.0
      %610 = vmatprep.mubr.f32.mxu0 0.0
      %611 = vmatmul.mubr.f32.gmra.mrb[0].mxu0 %v523
      %v612 = vpop.f32.mrb[0].mxu0
      %v613 = vadd.f32 %v483, %v612
      %v614 = vpop.f32.mrb[0].mxu0
      %615 = vmatprep.mubr.f32.mxu0 0.0
      %616 = vmatmul.mubr.f32.gmra.mrb[0].mxu0 %v526
      %v617 = vpop.f32.mrb[0].mxu0
      %v618 = vadd.f32 %v488, %v617
      %v619 = vpop.f32.mrb[0].mxu0
      %620 = vmatprep.mubr.f32.mxu0 0.0
      %621 = vmatmul.mubr.f32.gmra.mrb[0].mxu0 %v529
      %v622 = vpop.f32.mrb[0].mxu0
      %v623 = vadd.f32 %v493, %v622
      %v624 = vpop.f32.mrb[0].mxu0
      %625 = vmatprep.mubr.f32.mxu0 0.0
      %626 = vmatmul.mubr.f32.gmra.mrb[0].mxu0 %v532
      %v627 = vpop.f32.mrb[0].mxu0
      %v628 = vadd.f32 %v498, %v627
      %v629 = vpop.f32.mrb[0].mxu0
      %630 = vmatprep.mubr.f32.mxu0 0.0
      %631 = vmatmul.mubr.f32.gmra.mrb[0].mxu0 %v535
      %v632 = vpop.f32.mrb[0].mxu0
      %v633 = vadd.f32 %v503, %v632
      %v634 = vpop.f32.mrb[0].mxu0
      %635 = vmatprep.mubr.f32.mxu0 0.0
      %636 = vmatmul.mubr.f32.gmra.mrb[0].mxu0 %v538
      %v637 = vpop.f32.mrb[0].mxu0
      %v638 = vadd.f32 %v508, %v637
      %v639 = vpop.f32.mrb[0].mxu0
      %640 = vmatprep.mubr.f32.mxu0 0.0
      %641 = vmatmul.mubr.f32.gmra.mrb[0].mxu0 %v541
      %v642 = vpop.f32.mrb[0].mxu0
      %v643 = vadd.f32 %v513, %v642
      %v644 = vpop.f32.mrb[0].mxu0
      %645 = vmatprep.mubr.f32.mxu0 0.0
      %646 = vmatmul.mubr.f32.gmra.mrb[0].mxu0 %v544
      %v647 = vpop.f32.mrb[0].mxu0
      %v648 = vadd.f32 %v518, %v647
      %v649 = vpop.f32.mrb[0].mxu0
      %650 = vdwg.mxu0
      %v651 = vld [vmem:[%s357] sm:$0x1]
      %v653 = vlaneseq
      %v654 = vshrl.u32 %v653, 7
      %v655 = vsub.s32 0, %v654
      %v656 = vrot.slane %v651, %v655
      %v658 = vadd.f32 %v613, %v656
      %v659 = vadd.f32 %v618, %v656
      %v660 = vadd.f32 %v623, %v656
      %v661 = vadd.f32 %v628, %v656
      %v662 = vadd.f32 %v633, %v656
      %v663 = vadd.f32 %v638, %v656
      %v664 = vadd.f32 %v643, %v656
      %v665 = vadd.f32 %v648, %v656
      %v666 = vmax.f32 %v658, 0.0
      %v667 = vmax.f32 %v659, 0.0
      %v668 = vmax.f32 %v660, 0.0
      %v669 = vmax.f32 %v661, 0.0
      %v670 = vmax.f32 %v662, 0.0
      %v671 = vmax.f32 %v663, 0.0
      %v672 = vmax.f32 %v664, 0.0
      %v673 = vmax.f32 %v665, 0.0
      %v674 = vld [vmem:[%s5] sm:$0xff]
      %v675 = vld [vmem:[%s5 + $0x8] sm:$0xff]
      %v676 = vld [vmem:[%s5 + $0x10] sm:$0xff]
      %v677 = vld [vmem:[%s5 + $0x18] sm:$0xff]
      %v678 = vld [vmem:[%s6] sm:$0x1]
      %v680 = vlaneseq
      %v681 = vshrl.u32 %v680, 7
      %v682 = vsub.s32 0, %v681
      %v683 = vrot.slane %v678, %v682
      %v686 = vsel %vm521, %v666, 0
      %v689 = vsel %vm521, %v667, 0
      %v692 = vsel %vm521, %v668, 0
      %v695 = vsel %vm521, %v669, 0
      %v698 = vsel %vm521, %v670, 0
      %v701 = vsel %vm521, %v671, 0
      %v704 = vsel %vm521, %v672, 0
      %v707 = vsel %vm521, %v673, 0
      %709 = vmatprep.subr.mxu0 0.0
      %710 = vmatpush1.msra.mxu0 %v674
      %711 = vmatprep.subr.mxu0 0.0
      %712 = vmatpush1.msra.mxu0 %v675
      %713 = vmatprep.subr.mxu0 0.0
      %714 = vmatpush1.msra.mxu0 %v676
      %715 = vmatprep.subr.mxu0 0.0
      %716 = vmatpush1.msra.mxu0 %v677
      %717 = vmatprep.subr.mxu0 0.0
      %718 = vmatpush1.msra.mxu0 0.0
      %719 = vmatprep.subr.mxu0 0.0
      %720 = vmatpush1.msra.mxu0 0.0
      %721 = vmatprep.subr.mxu0 0.0
      %722 = vmatpush1.msra.mxu0 0.0
      %723 = vmatprep.subr.mxu0 0.0
      %724 = vmatpush1.msra.mxu0 0.0
      %725 = vmatprep.subr.mxu0 0.0
      %726 = vmatpush1.msra.mxu0 0.0
      %727 = vmatprep.subr.mxu0 0.0
      %728 = vmatpush1.msra.mxu0 0.0
      %729 = vmatprep.subr.mxu0 0.0
      %730 = vmatpush1.msra.mxu0 0.0
      %731 = vmatprep.subr.mxu0 0.0
      %732 = vmatpush1.msra.mxu0 0.0
      %733 = vmatprep.subr.mxu0 0.0
      %734 = vmatpush1.msra.mxu0 0.0
      %735 = vmatprep.subr.mxu0 0.0
      %736 = vmatpush1.msra.mxu0 0.0
      %737 = vmatprep.subr.mxu0 0.0
      %738 = vmatpush1.msra.mxu0 0.0
      %739 = vmatprep.subr.mxu0 0.0
      %740 = vmatpush1.msra.mxu0 0.0
      %741 = vmatprep.subr.mxu0 0.0
      %742 = vmatpush1.msra.mxu0 0.0
      %743 = vmatprep.subr.mxu0 0.0
      %744 = vmatpush1.msra.mxu0 0.0
      %745 = vmatprep.subr.mxu0 0.0
      %746 = vmatpush1.msra.mxu0 0.0
      %747 = vmatprep.subr.mxu0 0.0
      %748 = vmatpush1.msra.mxu0 0.0
      %749 = vmatprep.subr.mxu0 0.0
      %750 = vmatpush1.msra.mxu0 0.0
      %751 = vmatprep.subr.mxu0 0.0
      %752 = vmatpush1.msra.mxu0 0.0
      %753 = vmatprep.subr.mxu0 0.0
      %754 = vmatpush1.msra.mxu0 0.0
      %755 = vmatprep.subr.mxu0 0.0
      %756 = vmatpush1.msra.mxu0 0.0
      %757 = vmatprep.subr.mxu0 0.0
      %758 = vmatpush1.msra.mxu0 0.0
      %759 = vmatprep.subr.mxu0 0.0
      %760 = vmatpush1.msra.mxu0 0.0
      %761 = vmatprep.subr.mxu0 0.0
      %762 = vmatpush1.msra.mxu0 0.0
      %763 = vmatprep.subr.mxu0 0.0
      %764 = vmatpush1.msra.mxu0 0.0
      %765 = vmatprep.subr.mxu0 0.0
      %766 = vmatpush1.msra.mxu0 0.0
      %767 = vmatprep.subr.mxu0 0.0
      %768 = vmatpush1.msra.mxu0 0.0
      %769 = vmatprep.subr.mxu0 0.0
      %770 = vmatpush1.msra.mxu0 0.0
      %771 = vmatprep.subr.mxu0 0.0
      %772 = vmatpush1.msra.mxu0 0.0
      %773 = vmatprep.mubr.f32.mxu0 0.0
      %774 = vmatmul.mubr.f32.gmra.mrb[0].mxu0 %v686
      %v775 = vpop.f32.mrb[0].mxu0
      %v776 = vadd.f32 %v683, %v775
      %v777 = vpop.f32.mrb[0].mxu0
      %778 = vmatprep.mubr.f32.mxu0 0.0
      %779 = vmatmul.mubr.f32.gmra.mrb[0].mxu0 %v689
      %v780 = vpop.f32.mrb[0].mxu0
      %v781 = vadd.f32 %v683, %v780
      %v782 = vpop.f32.mrb[0].mxu0
      %783 = vmatprep.mubr.f32.mxu0 0.0
      %784 = vmatmul.mubr.f32.gmra.mrb[0].mxu0 %v692
      %v785 = vpop.f32.mrb[0].mxu0
      %v786 = vadd.f32 %v683, %v785
      %v787 = vpop.f32.mrb[0].mxu0
      %788 = vmatprep.mubr.f32.mxu0 0.0
      %789 = vmatmul.mubr.f32.gmra.mrb[0].mxu0 %v695
      %v790 = vpop.f32.mrb[0].mxu0
      %v791 = vadd.f32 %v683, %v790
      %v792 = vpop.f32.mrb[0].mxu0
      %793 = vmatprep.mubr.f32.mxu0 0.0
      %794 = vmatmul.mubr.f32.gmra.mrb[0].mxu0 %v698
      %v795 = vpop.f32.mrb[0].mxu0
      %v796 = vadd.f32 %v683, %v795
      %v797 = vpop.f32.mrb[0].mxu0
      %798 = vmatprep.mubr.f32.mxu0 0.0
      %799 = vmatmul.mubr.f32.gmra.mrb[0].mxu0 %v701
      %v800 = vpop.f32.mrb[0].mxu0
      %v801 = vadd.f32 %v683, %v800
      %v802 = vpop.f32.mrb[0].mxu0
      %803 = vmatprep.mubr.f32.mxu0 0.0
      %804 = vmatmul.mubr.f32.gmra.mrb[0].mxu0 %v704
      %v805 = vpop.f32.mrb[0].mxu0
      %v806 = vadd.f32 %v683, %v805
      %v807 = vpop.f32.mrb[0].mxu0
      %808 = vmatprep.mubr.f32.mxu0 0.0
      %809 = vmatmul.mubr.f32.gmra.mrb[0].mxu0 %v707
      %v810 = vpop.f32.mrb[0].mxu0
      %v811 = vadd.f32 %v683, %v810
      %v812 = vpop.f32.mrb[0].mxu0
      %813 = vdwg.mxu0
      %v814 = vxor.u32 %v776, 2147483648
      %v815 = vxor.u32 %v781, 2147483648
      %v816 = vxor.u32 %v786, 2147483648
      %v817 = vxor.u32 %v791, 2147483648
      %v818 = vxor.u32 %v796, 2147483648
      %v819 = vxor.u32 %v801, 2147483648
      %v820 = vxor.u32 %v806, 2147483648
      %v821 = vxor.u32 %v811, 2147483648
      %v822 = vmul.f32 %v814, 1.442695
      %v823 = vpow.pop %v822
      %v824 = vmul.f32 %v815, 1.442695
      %v825 = vpow.pop %v824
      %v826 = vmul.f32 %v816, 1.442695
      %v827 = vpow.pop %v826
      %v828 = vmul.f32 %v817, 1.442695
      %v829 = vpow.pop %v828
      %v830 = vmul.f32 %v818, 1.442695
      %v831 = vpow.pop %v830
      %v832 = vmul.f32 %v819, 1.442695
      %v833 = vpow.pop %v832
      %v834 = vmul.f32 %v820, 1.442695
      %v835 = vpow.pop %v834
      %v836 = vmul.f32 %v821, 1.442695
      %v837 = vpow.pop %v836
      %v838 = vadd.f32 %v823, 1.0
      %v839 = vadd.f32 %v825, 1.0
      %v840 = vadd.f32 %v827, 1.0
      %v841 = vadd.f32 %v829, 1.0
      %v842 = vadd.f32 %v831, 1.0
      %v843 = vadd.f32 %v833, 1.0
      %v844 = vadd.f32 %v835, 1.0
      %v845 = vadd.f32 %v837, 1.0
      %v846 = vrcp.pop %v838
      %v847 = vmul.f32 1.0, %v846
      %v848 = vrcp.pop %v839
      %v849 = vmul.f32 1.0, %v848
      %v850 = vrcp.pop %v840
      %v851 = vmul.f32 1.0, %v850
      %v852 = vrcp.pop %v841
      %v853 = vmul.f32 1.0, %v852
      %v854 = vrcp.pop %v842
      %v855 = vmul.f32 1.0, %v854
      %v856 = vrcp.pop %v843
      %v857 = vmul.f32 1.0, %v856
      %v858 = vrcp.pop %v844
      %v859 = vmul.f32 1.0, %v858
      %v860 = vrcp.pop %v845
      %v861 = vmul.f32 1.0, %v860
      %vm862 = vcmask 130048
      %863 = vst.msk [vmem:[%s366] sm:$0xff] %vm862, %v847
      %864 = vst.msk [vmem:[%s366 + $0x8] sm:$0xff] %vm862, %v849
      %865 = vst.msk [vmem:[%s366 + $0x10] sm:$0xff] %vm862, %v851
      %866 = vst.msk [vmem:[%s366 + $0x18] sm:$0xff] %vm862, %v853
      %867 = vst.msk [vmem:[%s366 + $0x20] sm:$0xff] %vm862, %v855
      %868 = vst.msk [vmem:[%s366 + $0x28] sm:$0xff] %vm862, %v857
      %869 = vst.msk [vmem:[%s366 + $0x30] sm:$0xff] %vm862, %v859
      %870 = vst.msk [vmem:[%s366 + $0x38] sm:$0xff] %vm862, %v861
      %s871 = smul.u32 8, %s23
      %p872 = scmp.lt.s32.totalorder %s22, 1
      %s873 = scalar_select %p872, %s22, 1
      %p874 = scmp.lt.s32.totalorder %s871, 7
      %s875 = scalar_select %p874, %s871, 7
      %s876 = smul.addr %s873, 8
      %s877 = sadd.s32 %s875, %s876
      %s878 = smul.addr %s877, 8
      %s879 = scalar_lea.vmem %s7, %s878
      // Predicated region
      $region49: #{feat_layers_forward.1} parent=47 // pred_check
        %p880 = pneg %p216
      $region50: #{feat_layers_forward.1} parent=47 // pred_check_branch
        %882 = sbr.rel (%p880) target = $region52
      $region51: #{feat_layers_forward.1} parent=47 // pred_region
        %s883 = smul.u32 8, %s23
      $region52: #{feat_layers_forward.1} parent=47 // pred_fallthru
        _
    $region48: #{feat_layers_forward.1} parent=5 // pred_fallthru
      _
    %p884 = scmp.le.s32.totalorder 2, %s13
    // Predicated region
    $region53: #{feat_layers_forward.1} parent=5 // pred_check
      %p885 = pneg %p884
    $region54: #{feat_layers_forward.1} parent=5 // pred_check_branch
      %887 = sbr.rel (%p885) target = $region56
    $region55: #{feat_layers_forward.1} parent=5 // pred_region
      %s888 = ssub.s32 %s13, 2
      // Predicated region
      $region57: #{feat_layers_forward.1} parent=55 // pred_check
        %p889 = pneg %p222
      $region58: #{feat_layers_forward.1} parent=55 // pred_check_branch
        %891 = sbr.rel (%p889) target = $region60
      $region59: #{feat_layers_forward.1} parent=55 // pred_region
        %s892 = smul.u32 8, %s25
        %p893 = scmp.lt.s32.totalorder %s24, 1
        %s894 = scalar_select %p893, %s24, 1
        %p895 = scmp.lt.s32.totalorder %s892, 7
        %s896 = scalar_select %p895, %s892, 7
        %s897 = smul.addr %s894, 8
        %s898 = sadd.s32 %s896, %s897
        %s899 = smul.addr %s898, 8
        %s900 = scalar_lea.vmem %s7, %s899
      $region60: #{feat_layers_forward.1} parent=55 // pred_fallthru
        _
    $region56: #{feat_layers_forward.1} parent=5 // pred_fallthru
      _
  $region6: #{feat_layers_forward.1} parent=0 // loop_footer
    %s17 = sadd.s32 1, %s13
  $region7: #{feat_layers_forward.1} parent=0 // loop_footer_branch
    %12 = sbr.rel target = $region3
  $region8: #{feat_layers_forward.1} parent=0 // loop_exit
    _

</llo_original>
